<compile_context>
chip_gen: v7x
topology: tpu7x:2x2x1
jax: 0.10.0
libtpu: 0.0.40
codegen_flags: <defaults>
</compile_context>

<pallas_src>
import jax
import jax.numpy as jnp
from jax.experimental import pallas as pl
from jax.experimental.pallas import tpu as pltpu

# ---------------- problem sizes (small, consistent with the module) ----------------
B = 8           # batch
IMG_DIM = 32    # image_dim
TXT_DIM = 48    # text_dim
OUT_DIM = 32    # output_dim (divisible by num_heads=8)
NUM_HEADS = 8
LANE_PACK = 4   # 4 logical rows of 32 lanes -> one 128-lane physical row


# ---------------- Pallas kernel ----------------
def fused_fusion_kernel(txt_ref, img_ref, w_txt_ref, w_img_ref, b_ref, out_ref):
    """out = txt_packed @ W_txt_bd + img_packed @ W_img_bd + b  (lane-dense folded form)."""
    acc = jnp.dot(txt_ref[...], w_txt_ref[...], preferred_element_type=jnp.float32)
    acc = acc + jnp.dot(img_ref[...], w_img_ref[...], preferred_element_type=jnp.float32)
    # Bias add kept in f32 (v5e has no bf16 VALU); cast only on the final store.
    out_ref[...] = (acc + b_ref[...]).astype(out_ref.dtype)


# ---------------- host-side exact weight folding + lane-dense block-diag ----------------
def fold_params(params, lane_pack=LANE_PACK):
    """Fold value_proj -> MHA v in-proj -> MHA out_proj -> output_proj(attn slice),
    then block-diagonalize so `lane_pack` batch rows share one 128-lane vreg row.

    Exactness assumptions (assert/document at call site): eval mode (dropout off),
    no attn_mask / key_padding_mask, single kv position (softmax == 1 per head).
    """
    w_txt = params["wv"] @ params["in_wv"] @ params["out_w"] @ params["op_wa"]    # [48, 32]
    w_img = params["op_wi"]                                                        # [32, 32]
    b = (((params["bv"] @ params["in_wv"] + params["in_bv"]) @ params["out_w"]
          + params["out_b"]) @ params["op_wa"] + params["op_b"])                   # [ 1, 32]

    # Block-diag expansion: input lanes [48j, 48j+48) -> output lanes [32j, 32j+32).
    w_txt_bd = jax.scipy.linalg.block_diag(*([w_txt] * lane_pack))   # [192, 128]
    w_img_bd = jax.scipy.linalg.block_diag(*([w_img] * lane_pack))   # [128, 128]
    b_bd = jnp.tile(b, (1, lane_pack))                               # [  1, 128]
    return w_txt_bd, w_img_bd, b_bd


# ---------------- wrapper ----------------
def modality_fusion_attention(img, txt, w_txt_bd, w_img_bd, b_bd, *,
                              block_rows=None, act_dtype=None):
    """img: [bsz, IMG_DIM], txt: [bsz, TXT_DIM] -> fused: [bsz, OUT_DIM] (f32).

    act_dtype=jnp.bfloat16 halves activation HBM bytes (kernel is HBM-bound at large
    batch); accumulation/bias stay f32. Weights are cast to match the activations.
    """
    bsz = img.shape[0]

    # Pad batch to a multiple of LANE_PACK so the lane-dense reshape is exact.
    pad = (-bsz) % LANE_PACK
    if pad:
        img = jnp.pad(img, ((0, pad), (0, 0)))
        txt = jnp.pad(txt, ((0, pad), (0, 0)))
    bp = bsz + pad
    rows = bp // LANE_PACK

    if act_dtype is not None:
        img = img.astype(act_dtype)
        txt = txt.astype(act_dtype)
        w_txt_bd = w_txt_bd.astype(act_dtype)
        w_img_bd = w_img_bd.astype(act_dtype)

    # Free contiguous views: 4 logical rows packed into one 128-lane physical row.
    txt_r = txt.reshape(rows, LANE_PACK * TXT_DIM)   # [rows, 192]
    img_r = img.reshape(rows, LANE_PACK * IMG_DIM)   # [rows, 128]

    if block_rows is None:
        # Cap = 1024 packed rows (= 4096 batch rows). f32 per-tile VMEM:
        #   txt 1024*192*4 + img 1024*128*4 + out 1024*128*4 ~= 1.8 MiB, x2 buffers
        # -> well inside the 32 MiB scoped VMEM on v7x; bf16 halves it again.
        cap = 1024
        if rows <= 8:
            block_rows = rows                      # single step; tiny batch is launch-bound
        else:
            # Aim for >= 8 grid steps so v7x's 2 TensorCores both get work and the
            # ~0.35 us per-step overhead amortizes; keep block_rows a multiple of 8.
            target = (rows + 7) // 8
            block_rows = min(cap, max(8, ((target + 7) // 8) * 8))
    grid = (pl.cdiv(rows, block_rows),)

    out = pl.pallas_call(
        fused_fusion_kernel,
        out_shape=jax.ShapeDtypeStruct((rows, LANE_PACK * OUT_DIM), jnp.float32),
        grid_spec=pltpu.PrefetchScalarGridSpec(
            num_scalar_prefetch=0,
            grid=grid,
            in_specs=[
                # Activations: batch-tiled. (Optional: pipeline_mode=pl.Buffered(3)
                # once block_rows is large -- sweep before committing.)
                pl.BlockSpec((block_rows, LANE_PACK * TXT_DIM), lambda i: (i, 0)),
                pl.BlockSpec((block_rows, LANE_PACK * IMG_DIM), lambda i: (i, 0)),
                # Weights / bias: constant index_map -> fetched once, not per step.
                pl.BlockSpec((LANE_PACK * TXT_DIM, LANE_PACK * OUT_DIM), lambda i: (0, 0)),
                pl.BlockSpec((LANE_PACK * IMG_DIM, LANE_PACK * OUT_DIM), lambda i: (0, 0)),
                pl.BlockSpec((1, LANE_PACK * OUT_DIM), lambda i: (0, 0)),
            ],
            out_specs=pl.BlockSpec((block_rows, LANE_PACK * OUT_DIM), lambda i: (i, 0)),
        ),
        compiler_params=pltpu.CompilerParams(
            dimension_semantics=("parallel",),
        ),
    )(txt_r, img_r, w_txt_bd, w_img_bd, b_bd)

    # Free view back to [bp, OUT_DIM]; drop padded rows.
    return out.reshape(bp, OUT_DIM)[:bsz]


# ---------------- pure-JAX reference (full unfused MHA math incl. softmax) ----------------
def reference(img, txt, params):
    q = img @ params["wq"] + params["bq"]
    k = txt @ params["wk"] + params["bk"]
    v = txt @ params["wv"] + params["bv"]
    qi = q @ params["in_wq"] + params["in_bq"]
    ki = k @ params["in_wk"] + params["in_bk"]
    vi = v @ params["in_wv"] + params["in_bv"]
    hd = OUT_DIM // NUM_HEADS
    bsz = img.shape[0]
    qh = qi.reshape(bsz, NUM_HEADS, hd)
    kh = ki.reshape(bsz, NUM_HEADS, hd)
    vh = vi.reshape(bsz, NUM_HEADS, hd)
    scores = jnp.sum(qh * kh, axis=-1, keepdims=True) / jnp.sqrt(hd)     # [B,H,1]
    probs = jax.nn.softmax(scores[..., None], axis=-1)[..., 0]           # identically 1
    attn = (probs * vh).reshape(bsz, OUT_DIM)
    attn_out = attn @ params["out_w"] + params["out_b"]
    fused = attn_out @ params["op_wa"] + img @ params["op_wi"] + params["op_b"]
    return fused


# ---------------- deterministic parameter init ----------------
def make_params(key):
    ks = jax.random.split(key, 16)
    n = lambda k, shape: (jax.random.normal(k, shape, jnp.float32) * 0.02)
    return {
        "wq": n(ks[0], (IMG_DIM, OUT_DIM)), "bq": n(ks[1], (1, OUT_DIM)),
        "wk": n(ks[2], (TXT_DIM, OUT_DIM)), "bk": n(ks[3], (1, OUT_DIM)),
        "wv": n(ks[4], (TXT_DIM, OUT_DIM)), "bv": n(ks[5], (1, OUT_DIM)),
        "in_wq": n(ks[6], (OUT_DIM, OUT_DIM)), "in_bq": n(ks[7], (1, OUT_DIM)),
        "in_wk": n(ks[8], (OUT_DIM, OUT_DIM)), "in_bk": n(ks[9], (1, OUT_DIM)),
        "in_wv": n(ks[10], (OUT_DIM, OUT_DIM)), "in_bv": n(ks[11], (1, OUT_DIM)),
        "out_w": n(ks[12], (OUT_DIM, OUT_DIM)), "out_b": n(ks[13], (1, OUT_DIM)),
        "op_wa": n(ks[14], (OUT_DIM, OUT_DIM)),
        "op_wi": n(ks[15], (IMG_DIM, OUT_DIM)),
        "op_b": jnp.zeros((1, OUT_DIM), jnp.float32),
    }


if __name__ == "__main__":
    key = jax.random.PRNGKey(0)
    k_img, k_txt, k_par, k_img2, k_txt2 = jax.random.split(key, 5)
    params = make_params(k_par)

    # One-time host-side fold + block-diag (exact: eval mode, no masks, 1 kv position).
    w_txt_bd, w_img_bd, b_bd = fold_params(params)

    # ---- tiny-batch f32 check (module's shipped shape; single grid step) ----
    img = jax.random.normal(k_img, (B, IMG_DIM), jnp.float32)
    txt = jax.random.normal(k_txt, (B, TXT_DIM), jnp.float32)
    out = jax.block_until_ready(
        modality_fusion_attention(img, txt, w_txt_bd, w_img_bd, b_bd))
    ref = reference(img, txt, params)
    assert out.shape == (B, OUT_DIM)
    assert jnp.allclose(out, ref, atol=1e-5, rtol=1e-5), "f32 mismatch vs reference"

    # ---- larger-batch bf16-activation check (multi-step grid; both TCs on v7x) ----
    B2 = 256
    img2 = jax.random.normal(k_img2, (B2, IMG_DIM), jnp.float32)
    txt2 = jax.random.normal(k_txt2, (B2, TXT_DIM), jnp.float32)
    out2 = jax.block_until_ready(
        modality_fusion_attention(img2, txt2, w_txt_bd, w_img_bd, b_bd,
                                  act_dtype=jnp.bfloat16))
    ref2 = reference(img2, txt2, params)
    assert out2.shape == (B2, OUT_DIM)
    assert jnp.allclose(out2, ref2, atol=2e-2, rtol=2e-2), "bf16 mismatch vs reference"

    print("KERNEL_OK")
</pallas_src>

<mosaic_0001>
module attributes {stable_mosaic.version = 11 : i64} {
  func.func @fused_fusion_kernel(%arg0: i32, %arg1: memref<2x192xf32, #tpu.memory_space<vmem>>, %arg2: memref<2x128xf32, #tpu.memory_space<vmem>>, %arg3: memref<192x128xf32, #tpu.memory_space<vmem>>, %arg4: memref<128x128xf32, #tpu.memory_space<vmem>>, %arg5: memref<1x128xf32, #tpu.memory_space<vmem>>, %arg6: memref<2x128xf32, #tpu.memory_space<vmem>>) attributes {dimension_semantics = [#tpu.dimension_semantics<parallel>], iteration_bounds = array<i64: 1>, scalar_prefetch = 0 : i64, scratch_operands = 0 : i64, tpu.core_type = #tpu.core_type<tc>, window_params = [{transform_indices = @transform_0, window_bounds = array<i64: 2, 192>}, {transform_indices = @transform_1, window_bounds = array<i64: 2, 128>}, {pipeline_mode = #tpu.pipeline_mode<synchronous>, transform_indices = @transform_2, window_bounds = array<i64: 192, 128>}, {pipeline_mode = #tpu.pipeline_mode<synchronous>, transform_indices = @transform_3, window_bounds = array<i64: 128, 128>}, {pipeline_mode = #tpu.pipeline_mode<synchronous>, transform_indices = @transform_4, window_bounds = array<i64: 1, 128>}, {transform_indices = @transform_5, window_bounds = array<i64: 2, 128>}]} {
    %c0 = arith.constant 0 : index
    %c0_0 = arith.constant 0 : index
    %0 = vector.load %arg1[%c0, %c0_0] : memref<2x192xf32, #tpu.memory_space<vmem>>, vector<2x192xf32>
    %c0_1 = arith.constant 0 : index
    %c0_2 = arith.constant 0 : index
    %1 = vector.load %arg3[%c0_1, %c0_2] : memref<192x128xf32, #tpu.memory_space<vmem>>, vector<192x128xf32>
    %cst = arith.constant dense<0.000000e+00> : vector<2x128xf32>
    %2 = tpu.matmul %0, %1, %cst {dimension_numbers = #tpu.dot_dimension_numbers<[1], [0], [0], [1], [0, 0, 1, 1], [], []>} : vector<2x192xf32>, vector<192x128xf32>, vector<2x128xf32> -> vector<2x128xf32>
    %c0_3 = arith.constant 0 : index
    %c0_4 = arith.constant 0 : index
    %3 = vector.load %arg2[%c0_3, %c0_4] : memref<2x128xf32, #tpu.memory_space<vmem>>, vector<2x128xf32>
    %c0_5 = arith.constant 0 : index
    %c0_6 = arith.constant 0 : index
    %4 = vector.load %arg4[%c0_5, %c0_6] : memref<128x128xf32, #tpu.memory_space<vmem>>, vector<128x128xf32>
    %cst_7 = arith.constant dense<0.000000e+00> : vector<2x128xf32>
    %5 = tpu.matmul %3, %4, %cst_7 {dimension_numbers = #tpu.dot_dimension_numbers<[1], [0], [0], [1], [0, 0, 1, 1], [], []>} : vector<2x128xf32>, vector<128x128xf32>, vector<2x128xf32> -> vector<2x128xf32>
    %6 = arith.addf %2, %5 : vector<2x128xf32>
    %c0_8 = arith.constant 0 : index
    %c0_9 = arith.constant 0 : index
    %7 = vector.load %arg5[%c0_8, %c0_9] : memref<1x128xf32, #tpu.memory_space<vmem>>, vector<1x128xf32>
    %8 = vector.broadcast %7 : vector<1x128xf32> to vector<2x128xf32>
    %9 = arith.addf %6, %8 : vector<2x128xf32>
    %c0_10 = arith.constant 0 : index
    %c0_11 = arith.constant 0 : index
    %10 = vector.load %arg6[%c0_10, %c0_11] : memref<2x128xf32, #tpu.memory_space<vmem>>, vector<2x128xf32>
    tpu.vector_store %arg6[%c0_10, %c0_11], %9 {strides = array<i32>} : memref<2x128xf32, #tpu.memory_space<vmem>>, vector<2x128xf32>,
    return
  }
  func.func @transform_0(%arg0: i32) -> (i32, i32) {
    %c0_i32 = arith.constant 0 : i32
    %c0_i32_0 = arith.constant 0 : i32
    return %arg0, %c0_i32 : i32, i32
  }
  func.func @transform_1(%arg0: i32) -> (i32, i32) {
    %c0_i32 = arith.constant 0 : i32
    %c0_i32_0 = arith.constant 0 : i32
    return %arg0, %c0_i32 : i32, i32
  }
  func.func @transform_2(%arg0: i32) -> (i32, i32) {
    %c0_i32 = arith.constant 0 : i32
    %c0_i32_0 = arith.constant 0 : i32
    %c0_i32_1 = arith.constant 0 : i32
    return %c0_i32, %c0_i32_0 : i32, i32
  }
  func.func @transform_3(%arg0: i32) -> (i32, i32) {
    %c0_i32 = arith.constant 0 : i32
    %c0_i32_0 = arith.constant 0 : i32
    %c0_i32_1 = arith.constant 0 : i32
    return %c0_i32, %c0_i32_0 : i32, i32
  }
  func.func @transform_4(%arg0: i32) -> (i32, i32) {
    %c0_i32 = arith.constant 0 : i32
    %c0_i32_0 = arith.constant 0 : i32
    %c0_i32_1 = arith.constant 0 : i32
    return %c0_i32, %c0_i32_0 : i32, i32
  }
  func.func @transform_5(%arg0: i32) -> (i32, i32) {
    %c0_i32 = arith.constant 0 : i32
    %c0_i32_0 = arith.constant 0 : i32
    return %arg0, %c0_i32 : i32, i32
  }
}

</mosaic_0001>

<llo_original>
// kernel: tpu_custom_call.1
$region0: #{tpu_custom_call.1}
  #allocation0 [shape = 'u32[]', space=smem, size = 0x4, offset = 0x4, fixed_abs, tag = 'smem constant byte address 0x4 - core index']
  #allocation1 [shape = 'u32[144,128]{1,0:T(1,128)}', space=vmem, size = 0x12000, scoped, tag = 'internal scratch']
  %s0 = inlined_call_operand.hbm [shape: f32[2,192], index: 0, kind: input, shape index: {}]
  %s1 = inlined_call_operand.vmem [shape: f32[2,128], index: 1, kind: input, shape index: {}]
  %s2 = inlined_call_operand.hbm [shape: f32[192,128], index: 2, kind: input, shape index: {}]
  %s3 = inlined_call_operand.hbm [shape: f32[128,128], index: 3, kind: input, shape index: {}]
  %s4 = inlined_call_operand.vmem [shape: f32[1,128], index: 4, kind: input, shape index: {}]
  %s5 = inlined_call_operand.hbm [shape: f32[2,128], index: 5, kind: output, shape index: {}]
  %s6 = sld [smem:[#allocation0]]
  $region42: #{tpu_custom_call.1} parent=0
    _
  %s8 = ssub.s32 1, %s6
  %s9 = scalar_select 0, %s8, %s6
  $region1: #{tpu_custom_call.1} parent=0
    #allocation2 [shape = 'u8[2048]{0}', space=vmem, size = 0x800, scoped, tag = 'input window, operand 0, single buffered']
    #allocation3 [shape = 's32[1]{0}', space=sflag, size = 0x4, scoped, tag = 'scoped memory for tpu_custom_call.1']
    #allocation4 [shape = 's32[1]{0}', space=sflag, size = 0x4, scoped, tag = 'scoped memory for tpu_custom_call.1']
    #allocation5 [shape = 'u8[98304]{0}', space=vmem, size = 0x18000, scoped, tag = 'input window, operand 2, single buffered']
    #allocation6 [shape = 's32[1]{0}', space=sflag, size = 0x4, scoped, tag = 'scoped memory for tpu_custom_call.1']
    #allocation7 [shape = 'u8[65536]{0}', space=vmem, size = 0x10000, scoped, tag = 'input window, operand 3, single buffered']
    #allocation8 [shape = 'u8[1024]{0}', space=vmem, size = 0x400, scoped, tag = 'output window, operand 0, single buffered']
    %10 = vsyncpa [#allocation3], 0
    %11 = vsyncpa [#allocation6], 0
    %12 = vsyncpa [#allocation4], 0
    // Predicated region
    $region2: #{tpu_custom_call.1} parent=1 // pred_check
      _
    $region3: #{tpu_custom_call.1} parent=1 // pred_check_branch
      %14 = sbr.rel (0) target = $region5
    $region4: #{tpu_custom_call.1} parent=1 // pred_region
      %s16 = ssub.s32 64, 64
      %17 = vsyncadd [#allocation3], %s16
      %s19 = sshll.u32 [#allocation2], 4
      %s20 = int_to_ptr.vmem [resolvable:$true] %s19
      %22 = dma.hbm_to_vmem [thread:$0]  %s0, 64, %s20, [#allocation3]
    $region5: #{tpu_custom_call.1} parent=1 // pred_fallthru
      _
    // Predicated region
    $region6: #{tpu_custom_call.1} parent=1 // pred_check
      _
    $region7: #{tpu_custom_call.1} parent=1 // pred_check_branch
      %24 = sbr.rel (0) target = $region9
    $region8: #{tpu_custom_call.1} parent=1 // pred_region
      _
    $region9: #{tpu_custom_call.1} parent=1 // pred_fallthru
      _
    // Predicated region
    $region10: #{tpu_custom_call.1} parent=1 // pred_check
      _
    $region11: #{tpu_custom_call.1} parent=1 // pred_check_branch
      %26 = sbr.rel (0) target = $region13
    $region12: #{tpu_custom_call.1} parent=1 // pred_region
      %s28 = ssub.s32 3072, 3072
      %29 = vsyncadd [#allocation6], %s28
      %s30 = sshll.u32 [#allocation5], 4
      %s31 = int_to_ptr.vmem [resolvable:$true] %s30
      %36 = dma.hbm_to_vmem [thread:$0]  %s2, 3072, %s31, [#allocation6], 128, 128, 8
    $region13: #{tpu_custom_call.1} parent=1 // pred_fallthru
      _
    // Predicated region
    $region14: #{tpu_custom_call.1} parent=1 // pred_check
      _
    $region15: #{tpu_custom_call.1} parent=1 // pred_check_branch
      %38 = sbr.rel (0) target = $region17
    $region16: #{tpu_custom_call.1} parent=1 // pred_region
      %s40 = ssub.s32 2048, 2048
      %41 = vsyncadd [#allocation6], %s40
      %s42 = sshll.u32 [#allocation7], 4
      %s43 = int_to_ptr.vmem [resolvable:$true] %s42
      %48 = dma.hbm_to_vmem [thread:$0]  %s3, 2048, %s43, [#allocation6], 128, 128, 8
    $region17: #{tpu_custom_call.1} parent=1 // pred_fallthru
      _
    // Predicated region
    $region18: #{tpu_custom_call.1} parent=1 // pred_check
      _
    $region19: #{tpu_custom_call.1} parent=1 // pred_check_branch
      %50 = sbr.rel (0) target = $region21
    $region20: #{tpu_custom_call.1} parent=1 // pred_region
      _
    $region21: #{tpu_custom_call.1} parent=1 // pred_fallthru
      _
    // Predicated region
    $region22: #{tpu_custom_call.1} parent=1 // pred_check
      _
    $region23: #{tpu_custom_call.1} parent=1 // pred_check_branch
      %52 = sbr.rel (0) target = $region25
    $region24: #{tpu_custom_call.1} parent=1 // pred_region
      %53 = dma.done [#allocation3], 64
    $region25: #{tpu_custom_call.1} parent=1 // pred_fallthru
      _
    // Predicated region
    $region26: #{tpu_custom_call.1} parent=1 // pred_check
      _
    $region27: #{tpu_custom_call.1} parent=1 // pred_check_branch
      %55 = sbr.rel (0) target = $region29
    $region28: #{tpu_custom_call.1} parent=1 // pred_region
      %56 = dma.done [#allocation6], 3072
    $region29: #{tpu_custom_call.1} parent=1 // pred_fallthru
      _
    // Predicated region
    $region30: #{tpu_custom_call.1} parent=1 // pred_check
      _
    $region31: #{tpu_custom_call.1} parent=1 // pred_check_branch
      %58 = sbr.rel (0) target = $region33
    $region32: #{tpu_custom_call.1} parent=1 // pred_region
      %59 = dma.done [#allocation6], 2048
    $region33: #{tpu_custom_call.1} parent=1 // pred_fallthru
      _
    %v60 = vld [vmem:[#allocation2] sm:$0xf]
    %v61 = vld [vmem:[#allocation5] sm:$0xff]
    %v62 = vld [vmem:[#allocation5 + $0x8] sm:$0xff]
    %v63 = vld [vmem:[#allocation5 + $0x10] sm:$0xff]
    %v64 = vld [vmem:[#allocation5 + $0x18] sm:$0xff]
    %v65 = vld [vmem:[#allocation5 + $0x20] sm:$0xff]
    %v66 = vld [vmem:[#allocation5 + $0x28] sm:$0xff]
    %v67 = vld [vmem:[#allocation5 + $0x30] sm:$0xff]
    %v68 = vld [vmem:[#allocation5 + $0x38] sm:$0xff]
    %v69 = vld [vmem:[#allocation5 + $0x40] sm:$0xff]
    %v70 = vld [vmem:[#allocation5 + $0x48] sm:$0xff]
    %v71 = vld [vmem:[#allocation5 + $0x50] sm:$0xff]
    %v72 = vld [vmem:[#allocation5 + $0x58] sm:$0xff]
    %v73 = vld [vmem:[#allocation5 + $0x60] sm:$0xff]
    %v74 = vld [vmem:[#allocation5 + $0x68] sm:$0xff]
    %v75 = vld [vmem:[#allocation5 + $0x70] sm:$0xff]
    %v76 = vld [vmem:[#allocation5 + $0x78] sm:$0xff]
    %v77 = vld [vmem:[#allocation5 + $0x80] sm:$0xff]
    %v78 = vld [vmem:[#allocation5 + $0x88] sm:$0xff]
    %v79 = vld [vmem:[#allocation5 + $0x90] sm:$0xff]
    %v80 = vld [vmem:[#allocation5 + $0x98] sm:$0xff]
    %v81 = vld [vmem:[#allocation5 + $0xa0] sm:$0xff]
    %v82 = vld [vmem:[#allocation5 + $0xa8] sm:$0xff]
    %v83 = vld [vmem:[#allocation5 + $0xb0] sm:$0xff]
    %v84 = vld [vmem:[#allocation5 + $0xb8] sm:$0xff]
    %v85 = vld [vmem:[%s1] sm:$0x3]
    %v86 = vld [vmem:[#allocation7] sm:$0xff]
    %v87 = vld [vmem:[#allocation7 + $0x8] sm:$0xff]
    %v88 = vld [vmem:[#allocation7 + $0x10] sm:$0xff]
    %v89 = vld [vmem:[#allocation7 + $0x18] sm:$0xff]
    %v90 = vld [vmem:[#allocation7 + $0x20] sm:$0xff]
    %v91 = vld [vmem:[#allocation7 + $0x28] sm:$0xff]
    %v92 = vld [vmem:[#allocation7 + $0x30] sm:$0xff]
    %v93 = vld [vmem:[#allocation7 + $0x38] sm:$0xff]
    %v94 = vld [vmem:[#allocation7 + $0x40] sm:$0xff]
    %v95 = vld [vmem:[#allocation7 + $0x48] sm:$0xff]
    %v96 = vld [vmem:[#allocation7 + $0x50] sm:$0xff]
    %v97 = vld [vmem:[#allocation7 + $0x58] sm:$0xff]
    %v98 = vld [vmem:[#allocation7 + $0x60] sm:$0xff]
    %v99 = vld [vmem:[#allocation7 + $0x68] sm:$0xff]
    %v100 = vld [vmem:[#allocation7 + $0x70] sm:$0xff]
    %v101 = vld [vmem:[#allocation7 + $0x78] sm:$0xff]
    %102 = vmatprep.subr.mxu0 0.0
    %103 = vmatpush1.msra.mxu0 %v86
    %104 = vmatprep.subr.mxu0 0.0
    %105 = vmatpush1.msra.mxu0 %v87
    %106 = vmatprep.subr.mxu0 0.0
    %107 = vmatpush1.msra.mxu0 %v88
    %108 = vmatprep.subr.mxu0 0.0
    %109 = vmatpush1.msra.mxu0 %v89
    %110 = vmatprep.subr.mxu0 0.0
    %111 = vmatpush1.msra.mxu0 %v90
    %112 = vmatprep.subr.mxu0 0.0
    %113 = vmatpush1.msra.mxu0 %v91
    %114 = vmatprep.subr.mxu0 0.0
    %115 = vmatpush1.msra.mxu0 %v92
    %116 = vmatprep.subr.mxu0 0.0
    %117 = vmatpush1.msra.mxu0 %v93
    %118 = vmatprep.subr.mxu0 0.0
    %119 = vmatpush1.msra.mxu0 %v94
    %120 = vmatprep.subr.mxu0 0.0
    %121 = vmatpush1.msra.mxu0 %v95
    %122 = vmatprep.subr.mxu0 0.0
    %123 = vmatpush1.msra.mxu0 %v96
    %124 = vmatprep.subr.mxu0 0.0
    %125 = vmatpush1.msra.mxu0 %v97
    %126 = vmatprep.subr.mxu0 0.0
    %127 = vmatpush1.msra.mxu0 %v98
    %128 = vmatprep.subr.mxu0 0.0
    %129 = vmatpush1.msra.mxu0 %v99
    %130 = vmatprep.subr.mxu0 0.0
    %131 = vmatpush1.msra.mxu0 %v100
    %132 = vmatprep.subr.mxu0 0.0
    %133 = vmatpush1.msra.mxu0 %v101
    %134 = vmatprep.subr.mxu0 0.0
    %135 = vmatpush1.msra.mxu0 0.0
    %136 = vmatprep.subr.mxu0 0.0
    %137 = vmatpush1.msra.mxu0 0.0
    %138 = vmatprep.subr.mxu0 0.0
    %139 = vmatpush1.msra.mxu0 0.0
    %140 = vmatprep.subr.mxu0 0.0
    %141 = vmatpush1.msra.mxu0 0.0
    %142 = vmatprep.subr.mxu0 0.0
    %143 = vmatpush1.msra.mxu0 0.0
    %144 = vmatprep.subr.mxu0 0.0
    %145 = vmatpush1.msra.mxu0 0.0
    %146 = vmatprep.subr.mxu0 0.0
    %147 = vmatpush1.msra.mxu0 0.0
    %148 = vmatprep.subr.mxu0 0.0
    %149 = vmatpush1.msra.mxu0 0.0
    %150 = vmatprep.subr.mxu0 0.0
    %151 = vmatpush1.msra.mxu0 0.0
    %152 = vmatprep.subr.mxu0 0.0
    %153 = vmatpush1.msra.mxu0 0.0
    %154 = vmatprep.subr.mxu0 0.0
    %155 = vmatpush1.msra.mxu0 0.0
    %156 = vmatprep.subr.mxu0 0.0
    %157 = vmatpush1.msra.mxu0 0.0
    %158 = vmatprep.subr.mxu0 0.0
    %159 = vmatpush1.msra.mxu0 0.0
    %160 = vmatprep.subr.mxu0 0.0
    %161 = vmatpush1.msra.mxu0 0.0
    %162 = vmatprep.subr.mxu0 0.0
    %163 = vmatpush1.msra.mxu0 0.0
    %164 = vmatprep.subr.mxu0 0.0
    %165 = vmatpush1.msra.mxu0 0.0
    %166 = vmatprep.mubr.f32.mxu0 0.0
    %167 = vmatmul.mubr.f32.gmra.mrb[0].mxu0 %v85
    %v168 = vpop.f32.mrb[0].mxu0
    %v169 = vadd.f32 0.0, %v168
    %v170 = vpop.f32.mrb[0].mxu0
    %171 = vdwg.mxu0
    %v174 = vunpack.c.l.s4 1983009808
    %v175 = vunpack.c.0.s8 %v174
    %v176 = vlaneseq
    %v177 = vshrl.u32 %v176, 7
    %v178 = vsub.s32 %v175, %v177
    %v179 = vrot.slane %v60, %v178
    %v180 = vcombine.high %v179, %v179
    %vm182 = vcmask 523264
    %v183 = vsel %vm182, %v180, 0
    %185 = vmatprep.subr.mxu0 0.0
    %186 = vmatpush1.msra.mxu0 %v61
    %187 = vmatprep.subr.mxu0 0.0
    %188 = vmatpush1.msra.mxu0 %v62
    %189 = vmatprep.subr.mxu0 0.0
    %190 = vmatpush1.msra.mxu0 %v63
    %191 = vmatprep.subr.mxu0 0.0
    %192 = vmatpush1.msra.mxu0 %v64
    %193 = vmatprep.subr.mxu0 0.0
    %194 = vmatpush1.msra.mxu0 %v65
    %195 = vmatprep.subr.mxu0 0.0
    %196 = vmatpush1.msra.mxu0 %v66
    %197 = vmatprep.subr.mxu0 0.0
    %198 = vmatpush1.msra.mxu0 %v67
    %199 = vmatprep.subr.mxu0 0.0
    %200 = vmatpush1.msra.mxu0 %v68
    %201 = vmatprep.subr.mxu0 0.0
    %202 = vmatpush1.msra.mxu0 %v69
    %203 = vmatprep.subr.mxu0 0.0
    %204 = vmatpush1.msra.mxu0 %v70
    %205 = vmatprep.subr.mxu0 0.0
    %206 = vmatpush1.msra.mxu0 %v71
    %207 = vmatprep.subr.mxu0 0.0
    %208 = vmatpush1.msra.mxu0 %v72
    %209 = vmatprep.subr.mxu0 0.0
    %210 = vmatpush1.msra.mxu0 %v73
    %211 = vmatprep.subr.mxu0 0.0
    %212 = vmatpush1.msra.mxu0 %v74
    %213 = vmatprep.subr.mxu0 0.0
    %214 = vmatpush1.msra.mxu0 %v75
    %215 = vmatprep.subr.mxu0 0.0
    %216 = vmatpush1.msra.mxu0 %v76
    %217 = vmatprep.subr.mxu0 0.0
    %218 = vmatpush1.msra.mxu0 %v77
    %219 = vmatprep.subr.mxu0 0.0
    %220 = vmatpush1.msra.mxu0 %v78
    %221 = vmatprep.subr.mxu0 0.0
    %222 = vmatpush1.msra.mxu0 %v79
    %223 = vmatprep.subr.mxu0 0.0
    %224 = vmatpush1.msra.mxu0 %v80
    %225 = vmatprep.subr.mxu0 0.0
    %226 = vmatpush1.msra.mxu0 %v81
    %227 = vmatprep.subr.mxu0 0.0
    %228 = vmatpush1.msra.mxu0 %v82
    %229 = vmatprep.subr.mxu0 0.0
    %230 = vmatpush1.msra.mxu0 %v83
    %231 = vmatprep.subr.mxu0 0.0
    %232 = vmatpush1.msra.mxu0 %v84
    %233 = vmatprep.subr.mxu0 0.0
    %234 = vmatpush1.msra.mxu0 0.0
    %235 = vmatprep.subr.mxu0 0.0
    %236 = vmatpush1.msra.mxu0 0.0
    %237 = vmatprep.subr.mxu0 0.0
    %238 = vmatpush1.msra.mxu0 0.0
    %239 = vmatprep.subr.mxu0 0.0
    %240 = vmatpush1.msra.mxu0 0.0
    %241 = vmatprep.subr.mxu0 0.0
    %242 = vmatpush1.msra.mxu0 0.0
    %243 = vmatprep.subr.mxu0 0.0
    %244 = vmatpush1.msra.mxu0 0.0
    %245 = vmatprep.subr.mxu0 0.0
    %246 = vmatpush1.msra.mxu0 0.0
    %247 = vmatprep.subr.mxu0 0.0
    %248 = vmatpush1.msra.mxu0 0.0
    %249 = vmatprep.mubr.f32.mxu0 %v183
    %250 = vmatmul.mubr.f32.gmra.mrb[0].mxu0 %v179
    %v251 = vpop.f32.mrb[0].mxu0
    %v252 = vadd.f32 %v169, %v251
    %v253 = vpop.f32.mrb[0].mxu0
    %254 = vdwg.mxu0
    %v255 = vld [vmem:[%s4] sm:$0x1]
    %v257 = vlaneseq
    %v258 = vshrl.u32 %v257, 7
    %v259 = vsub.s32 0, %v258
    %v260 = vrot.slane %v255, %v259
    %v262 = vadd.f32 %v252, %v260
    %263 = vst [vmem:[#allocation8] sm:$0x3] %v262
    // Predicated region
    $region34: #{tpu_custom_call.1} parent=1 // pred_check
      _
    $region35: #{tpu_custom_call.1} parent=1 // pred_check_branch
      %265 = sbr.rel (0) target = $region37
    $region36: #{tpu_custom_call.1} parent=1 // pred_region
      %s267 = ssub.s32 32, 32
      %268 = vsyncadd [#allocation4], %s267
      %s270 = sshll.u32 [#allocation8], 4
      %s271 = int_to_ptr.vmem [resolvable:$true] %s270
      %273 = dma.vmem_to_hbm [thread:$0]  %s271, 32, %s5, [#allocation4]
    $region37: #{tpu_custom_call.1} parent=1 // pred_fallthru
      _
    // Predicated region
    $region38: #{tpu_custom_call.1} parent=1 // pred_check
      _
    $region39: #{tpu_custom_call.1} parent=1 // pred_check_branch
      %275 = sbr.rel (0) target = $region41
    $region40: #{tpu_custom_call.1} parent=1 // pred_region
      %276 = dma.done [#allocation4], 32
    $region41: #{tpu_custom_call.1} parent=1 // pred_fallthru
      _
    %277 = vsyncpa [#allocation3], 1
    %278 = vsyncpa [#allocation6], 1
    %279 = vsyncpa [#allocation4], 1

</llo_original>
